<compile_context>
chip_gen: v7x
topology: tpu7x:2x2x1
jax: 0.10.0
libtpu: 0.0.40
codegen_flags: <defaults>
</compile_context>

<pallas_src>
import functools

import jax
import jax.numpy as jnp
from jax.experimental import pallas as pl
from jax.experimental.pallas import tpu as pltpu

_POISSON_EPS = 1e-8                 # torch F.poisson_nll_loss default eps
_TL_CAP = 8 * 1024                  # max lane tile (multiple of 128)
_VMEM_BUDGET = 16 * 1024 * 1024     # pipeline buffers + in-kernel f32 temps


def _round_up(a, b):
    return (a + b - 1) // b * b


def _pick_tiles(n, l, x_itemsize, t_itemsize, lane_cap):
    """Choose (row_tile, lane_tile) with no wrapper-side padding.

    lane_tile: full L if it fits, else a 128-multiple cap (ragged last block is
    lane-masked in the kernel).  row_tile: multiple of the dtype sublane
    packing (8 f32 / 16 bf16 / 32 int8), sized to the VMEM budget, and capped
    at ~half the rows so the parallel row axis produces >=2 blocks (v7x).
    """
    lane_tile = l if l <= lane_cap else lane_cap
    sub = max(8, 32 // min(x_itemsize, t_itemsize))   # dtype sublane packing
    if n <= sub:
        return n, int(lane_tile)                      # single full-dim row block
    n_rounded = _round_up(n, sub)
    # 2 pipeline buffers per input + ~6 full-block f32 temps inside the kernel.
    bytes_per_row = lane_tile * (2 * (x_itemsize + t_itemsize) + 24)
    row_cap = max(sub, (_VMEM_BUDGET // bytes_per_row) // sub * sub)
    if n_rounded >= 2 * sub:                          # keep >=2 row blocks (v7x)
        split_cap = max(sub, (n_rounded // 2) // sub * sub)
    else:
        split_cap = n_rounded
    return int(min(row_cap, n_rounded, split_cap)), int(lane_tile)


def _loss_kernel(x_ref, t_ref, pois_ref, mult_ref, se_ref, st_ref, stx_ref,
                 *, n_rows, n_cols, row_tile, lane_tile, mask_rows, mask_cols):
    """Streams (row_tile, lane_tile) tiles; carries per-row sums across L.

    x_ref, t_ref : input / target tiles (native dtype, upcast in-kernel).
    pois_ref     : (row_tile, 1) per-row Poisson NLL (written at last L block).
    mult_ref     : (row_tile, 1) per-row multinomial NLL sum over L.
    se/st/stx    : (row_tile, 1) VMEM carries: sum(exp(x)), sum(t), sum(t*x).
    """
    # program_id/num_programs hoisted to top level (NOT inside pl.when bodies).
    i = pl.program_id(0)
    j = pl.program_id(1)
    last_j = pl.num_programs(1) - 1

    @pl.when(j == 0)
    def _init():
        se_ref[...] = jnp.zeros_like(se_ref)
        st_ref[...] = jnp.zeros_like(st_ref)
        stx_ref[...] = jnp.zeros_like(stx_ref)

    x = x_ref[...].astype(jnp.float32)
    t = t_ref[...].astype(jnp.float32)

    e = jnp.exp(x)                    # only per-element transcendental
    tx = t * x
    if mask_cols:
        # Ragged last L block: garbage lanes must not contaminate the sums.
        col = j * lane_tile + jax.lax.broadcasted_iota(jnp.int32, x.shape, 1)
        lane_ok = col < n_cols
        zero = jnp.zeros_like(e)
        e = jnp.where(lane_ok, e, zero)
        t = jnp.where(lane_ok, t, zero)
        tx = jnp.where(lane_ok, tx, zero)

    se_ref[...] += jnp.sum(e, axis=-1, keepdims=True)
    st_ref[...] += jnp.sum(t, axis=-1, keepdims=True)
    stx_ref[...] += jnp.sum(tx, axis=-1, keepdims=True)

    @pl.when(j == last_j)
    def _finalize():
        tot_e = se_ref[...]
        tot_t = st_ref[...]
        sum_tx = stx_ref[...]
        log_tot_e = jnp.log(tot_e + _POISSON_EPS)
        # Poisson NLL per row (log_input=False, torch default eps=1e-8).
        pois = tot_e - tot_t * log_tot_e
        # Multinomial: sum_L(-t * log(e/tot_e)) = tot_t*log(tot_e) - sum(t*x).
        mult = tot_t * log_tot_e - sum_tx
        if mask_rows:
            # Ragged last row block: zero garbage rows (they would be dropped
            # by the clamped output DMA anyway; keep this for belt-and-braces).
            row = i * row_tile + jax.lax.broadcasted_iota(jnp.int32, pois.shape, 0)
            row_ok = row < n_rows
            pois = jnp.where(row_ok, pois, 0.0)
            mult = jnp.where(row_ok, mult, 0.0)
        pois_ref[...] = pois
        mult_ref[...] = mult


@functools.partial(jax.jit, static_argnames=("total_weight", "lane_tile_cap"))
def task_wise_poisson_multinomial_loss(inp, tgt, *, total_weight=1.0,
                                       lane_tile_cap=_TL_CAP):
    """inp, tgt: (..., L, 1) arrays (same shapes as the PyTorch module)."""
    x = jnp.squeeze(inp, axis=-1)          # keep native dtype; kernel upcasts
    t = jnp.squeeze(tgt, axis=-1)
    l = x.shape[-1]
    x = x.reshape(-1, l)                   # collapse leading batch/task dims
    t = t.reshape(-1, l)
    n = x.shape[0]

    row_tile, lane_tile = _pick_tiles(n, l, x.dtype.itemsize, t.dtype.itemsize,
                                      lane_tile_cap)
    grid = (pl.cdiv(n, row_tile), pl.cdiv(l, lane_tile))

    kernel = functools.partial(
        _loss_kernel,
        n_rows=n, n_cols=l, row_tile=row_tile, lane_tile=lane_tile,
        mask_rows=(n % row_tile != 0), mask_cols=(l % lane_tile != 0))

    cost = pl.CostEstimate(
        flops=5 * n * l,
        transcendentals=n * l + n,
        bytes_accessed=n * l * (x.dtype.itemsize + t.dtype.itemsize) + 8 * n)

    pois_rows, mult_rows = pl.pallas_call(
        kernel,
        out_shape=(
            jax.ShapeDtypeStruct((n, 1), jnp.float32),
            jax.ShapeDtypeStruct((n, 1), jnp.float32),
        ),
        grid_spec=pltpu.PrefetchScalarGridSpec(
            num_scalar_prefetch=0,
            grid=grid,
            in_specs=[
                pl.BlockSpec((row_tile, lane_tile), lambda i, j: (i, j)),
                pl.BlockSpec((row_tile, lane_tile), lambda i, j: (i, j)),
            ],
            out_specs=[
                pl.BlockSpec((row_tile, 1), lambda i, j: (i, 0)),
                pl.BlockSpec((row_tile, 1), lambda i, j: (i, 0)),
            ],
            scratch_shapes=[
                pltpu.VMEM((row_tile, 1), jnp.float32),
                pltpu.VMEM((row_tile, 1), jnp.float32),
                pltpu.VMEM((row_tile, 1), jnp.float32),
            ],
        ),
        compiler_params=pltpu.CompilerParams(
            dimension_semantics=("parallel", "arbitrary"),
            vmem_limit_bytes=32 * 1024 * 1024,
        ),
        cost_estimate=cost,
    )(x, t)

    poisson_term = total_weight * (jnp.sum(pois_rows) / n)   # mean over rows
    multinomial_term = jnp.sum(mult_rows) / (n * l)          # mean over elements
    return multinomial_term + poisson_term


def _reference_loss(inp, tgt, total_weight=1.0):
    """Pure-JAX reference mirroring the PyTorch forward."""
    x = jnp.squeeze(inp, axis=-1).astype(jnp.float32)
    t = jnp.squeeze(tgt, axis=-1).astype(jnp.float32)
    e = jnp.exp(x)
    tot_e = e.sum(-1)
    tot_t = t.sum(-1)
    poisson = jnp.mean(tot_e - tot_t * jnp.log(tot_e + _POISSON_EPS)) * total_weight
    mult = jnp.mean(-t * jnp.log(e / tot_e[..., None]))
    return mult + poisson


if __name__ == "__main__":
    key = jax.random.PRNGKey(0)
    k1, k2, k3, k4, k5, k6 = jax.random.split(key, 6)

    # Case 1: aligned (batch, tasks, length, 1) f32 — single L block.
    inp1 = jax.random.normal(k1, (2, 4, 256, 1), dtype=jnp.float32) * 0.5
    tgt1 = jax.random.uniform(k2, (2, 4, 256, 1), dtype=jnp.float32) * 5.0
    out1 = jax.block_until_ready(
        task_wise_poisson_multinomial_loss(inp1, tgt1, total_weight=1.0))
    ref1 = _reference_loss(inp1, tgt1, 1.0)
    assert jnp.allclose(out1, ref1, rtol=1e-4, atol=1e-3), (out1, ref1)

    # Case 2: unaligned rows & lanes; small lane cap forces ragged row/lane
    # blocks and exercises the in-kernel masks (no wrapper padding anywhere).
    inp2 = jax.random.normal(k3, (20, 200, 1), dtype=jnp.float32) * 0.5
    tgt2 = jax.random.uniform(k4, (20, 200, 1), dtype=jnp.float32) * 5.0
    out2 = jax.block_until_ready(
        task_wise_poisson_multinomial_loss(inp2, tgt2, total_weight=0.3,
                                           lane_tile_cap=128))
    ref2 = _reference_loss(inp2, tgt2, 0.3)
    assert jnp.allclose(out2, ref2, rtol=1e-4, atol=1e-3), (out2, ref2)

    # Case 3: bf16 activations + f32 counts — narrow HBM stream, in-kernel f32;
    # 2 row blocks so the "parallel" row axis feeds both v7x TensorCores.
    inp3 = (jax.random.normal(k5, (32, 256, 1), dtype=jnp.float32) * 0.5
            ).astype(jnp.bfloat16)
    tgt3 = jax.random.uniform(k6, (32, 256, 1), dtype=jnp.float32) * 5.0
    out3 = jax.block_until_ready(
        task_wise_poisson_multinomial_loss(inp3, tgt3, total_weight=1.0))
    ref3 = _reference_loss(inp3, tgt3, 1.0)
    assert jnp.allclose(out3, ref3, rtol=2e-3, atol=2e-3), (out3, ref3)

    print("KERNEL_OK")
</pallas_src>

<mosaic_0001>
module attributes {stable_mosaic.version = 11 : i64} {
  func.func @_loss_kernel(%arg0: i32, %arg1: i32, %arg2: memref<8x256xf32, #tpu.memory_space<vmem>>, %arg3: memref<8x256xf32, #tpu.memory_space<vmem>>, %arg4: memref<8x1xf32, #tpu.memory_space<vmem>>, %arg5: memref<8x1xf32, #tpu.memory_space<vmem>>, %arg6: memref<8x1xf32, #tpu.memory_space<vmem>>, %arg7: memref<8x1xf32, #tpu.memory_space<vmem>>, %arg8: memref<8x1xf32, #tpu.memory_space<vmem>>) attributes {dimension_semantics = [#tpu.dimension_semantics<parallel>, #tpu.dimension_semantics<arbitrary>], iteration_bounds = array<i64: 1, 1>, scalar_prefetch = 0 : i64, scratch_operands = 3 : i64, tpu.core_type = #tpu.core_type<tc>, window_params = [{transform_indices = @transform_0, window_bounds = array<i64: 8, 256>}, {transform_indices = @transform_1, window_bounds = array<i64: 8, 256>}, {transform_indices = @transform_2, window_bounds = array<i64: 8, 1>}, {transform_indices = @transform_3, window_bounds = array<i64: 8, 1>}]} {
    %c0_i32 = arith.constant 0 : i32
    %0 = arith.cmpi eq, %arg1, %c0_i32 : i32
    %1 = arith.extui %0 : i1 to i32
    %c0_i32_0 = arith.constant 0 : i32
    %2 = arith.cmpi ne, %1, %c0_i32_0 : i32
    scf.if %2 {
      %cst_20 = arith.constant 0.000000e+00 : f32
      %25 = vector.broadcast %cst_20 : f32 to vector<8x1xf32>
      %c0_21 = arith.constant 0 : index
      %c0_22 = arith.constant 0 : index
      %26 = vector.load %arg6[%c0_21, %c0_22] : memref<8x1xf32, #tpu.memory_space<vmem>>, vector<8x1xf32>
      tpu.vector_store %arg6[%c0_21, %c0_22], %25 {strides = array<i32>} : memref<8x1xf32, #tpu.memory_space<vmem>>, vector<8x1xf32>,
      %cst_23 = arith.constant 0.000000e+00 : f32
      %27 = vector.broadcast %cst_23 : f32 to vector<8x1xf32>
      %c0_24 = arith.constant 0 : index
      %c0_25 = arith.constant 0 : index
      %28 = vector.load %arg7[%c0_24, %c0_25] : memref<8x1xf32, #tpu.memory_space<vmem>>, vector<8x1xf32>
      tpu.vector_store %arg7[%c0_24, %c0_25], %27 {strides = array<i32>} : memref<8x1xf32, #tpu.memory_space<vmem>>, vector<8x1xf32>,
      %cst_26 = arith.constant 0.000000e+00 : f32
      %29 = vector.broadcast %cst_26 : f32 to vector<8x1xf32>
      %c0_27 = arith.constant 0 : index
      %c0_28 = arith.constant 0 : index
      %30 = vector.load %arg8[%c0_27, %c0_28] : memref<8x1xf32, #tpu.memory_space<vmem>>, vector<8x1xf32>
      tpu.vector_store %arg8[%c0_27, %c0_28], %29 {strides = array<i32>} : memref<8x1xf32, #tpu.memory_space<vmem>>, vector<8x1xf32>,
    } else {
    }
    %c0 = arith.constant 0 : index
    %c0_1 = arith.constant 0 : index
    %3 = vector.load %arg2[%c0, %c0_1] : memref<8x256xf32, #tpu.memory_space<vmem>>, vector<8x256xf32>
    %c0_2 = arith.constant 0 : index
    %c0_3 = arith.constant 0 : index
    %4 = vector.load %arg3[%c0_2, %c0_3] : memref<8x256xf32, #tpu.memory_space<vmem>>, vector<8x256xf32>
    %5 = math.exp %3 : vector<8x256xf32>
    %6 = arith.mulf %4, %3 : vector<8x256xf32>
    %c0_4 = arith.constant 0 : index
    %c0_5 = arith.constant 0 : index
    %7 = vector.load %arg6[%c0_4, %c0_5] : memref<8x1xf32, #tpu.memory_space<vmem>>, vector<8x1xf32>
    %cst = arith.constant dense<0.000000e+00> : vector<8xf32>
    %8 = vector.multi_reduction <add>, %5, %cst [1] : vector<8x256xf32> to vector<8xf32>
    %9 = vector.shape_cast %8 : vector<8xf32> to vector<8x1xf32>
    %10 = arith.addf %7, %9 : vector<8x1xf32>
    %c0_6 = arith.constant 0 : index
    %c0_7 = arith.constant 0 : index
    %11 = vector.load %arg6[%c0_6, %c0_7] : memref<8x1xf32, #tpu.memory_space<vmem>>, vector<8x1xf32>
    tpu.vector_store %arg6[%c0_6, %c0_7], %10 {strides = array<i32>} : memref<8x1xf32, #tpu.memory_space<vmem>>, vector<8x1xf32>,
    %c0_8 = arith.constant 0 : index
    %c0_9 = arith.constant 0 : index
    %12 = vector.load %arg7[%c0_8, %c0_9] : memref<8x1xf32, #tpu.memory_space<vmem>>, vector<8x1xf32>
    %cst_10 = arith.constant dense<0.000000e+00> : vector<8xf32>
    %13 = vector.multi_reduction <add>, %4, %cst_10 [1] : vector<8x256xf32> to vector<8xf32>
    %14 = vector.shape_cast %13 : vector<8xf32> to vector<8x1xf32>
    %15 = arith.addf %12, %14 : vector<8x1xf32>
    %c0_11 = arith.constant 0 : index
    %c0_12 = arith.constant 0 : index
    %16 = vector.load %arg7[%c0_11, %c0_12] : memref<8x1xf32, #tpu.memory_space<vmem>>, vector<8x1xf32>
    tpu.vector_store %arg7[%c0_11, %c0_12], %15 {strides = array<i32>} : memref<8x1xf32, #tpu.memory_space<vmem>>, vector<8x1xf32>,
    %c0_13 = arith.constant 0 : index
    %c0_14 = arith.constant 0 : index
    %17 = vector.load %arg8[%c0_13, %c0_14] : memref<8x1xf32, #tpu.memory_space<vmem>>, vector<8x1xf32>
    %cst_15 = arith.constant dense<0.000000e+00> : vector<8xf32>
    %18 = vector.multi_reduction <add>, %6, %cst_15 [1] : vector<8x256xf32> to vector<8xf32>
    %19 = vector.shape_cast %18 : vector<8xf32> to vector<8x1xf32>
    %20 = arith.addf %17, %19 : vector<8x1xf32>
    %c0_16 = arith.constant 0 : index
    %c0_17 = arith.constant 0 : index
    %21 = vector.load %arg8[%c0_16, %c0_17] : memref<8x1xf32, #tpu.memory_space<vmem>>, vector<8x1xf32>
    tpu.vector_store %arg8[%c0_16, %c0_17], %20 {strides = array<i32>} : memref<8x1xf32, #tpu.memory_space<vmem>>, vector<8x1xf32>,
    %c0_i32_18 = arith.constant 0 : i32
    %22 = arith.cmpi eq, %arg1, %c0_i32_18 : i32
    %23 = arith.extui %22 : i1 to i32
    %c0_i32_19 = arith.constant 0 : i32
    %24 = arith.cmpi ne, %23, %c0_i32_19 : i32
    scf.if %24 {
      %c0_20 = arith.constant 0 : index
      %c0_21 = arith.constant 0 : index
      %25 = vector.load %arg6[%c0_20, %c0_21] : memref<8x1xf32, #tpu.memory_space<vmem>>, vector<8x1xf32>
      %c0_22 = arith.constant 0 : index
      %c0_23 = arith.constant 0 : index
      %26 = vector.load %arg7[%c0_22, %c0_23] : memref<8x1xf32, #tpu.memory_space<vmem>>, vector<8x1xf32>
      %c0_24 = arith.constant 0 : index
      %c0_25 = arith.constant 0 : index
      %27 = vector.load %arg8[%c0_24, %c0_25] : memref<8x1xf32, #tpu.memory_space<vmem>>, vector<8x1xf32>
      %cst_26 = arith.constant 9.99999993E-9 : f32
      %28 = vector.broadcast %cst_26 : f32 to vector<8x1xf32>
      %29 = arith.addf %25, %28 : vector<8x1xf32>
      %30 = math.log %29 : vector<8x1xf32>
      %31 = arith.mulf %26, %30 : vector<8x1xf32>
      %32 = arith.subf %25, %31 : vector<8x1xf32>
      %33 = arith.mulf %26, %30 : vector<8x1xf32>
      %34 = arith.subf %33, %27 : vector<8x1xf32>
      %c0_27 = arith.constant 0 : index
      %c0_28 = arith.constant 0 : index
      %35 = vector.load %arg4[%c0_27, %c0_28] : memref<8x1xf32, #tpu.memory_space<vmem>>, vector<8x1xf32>
      tpu.vector_store %arg4[%c0_27, %c0_28], %32 {strides = array<i32>} : memref<8x1xf32, #tpu.memory_space<vmem>>, vector<8x1xf32>,
      %c0_29 = arith.constant 0 : index
      %c0_30 = arith.constant 0 : index
      %36 = vector.load %arg5[%c0_29, %c0_30] : memref<8x1xf32, #tpu.memory_space<vmem>>, vector<8x1xf32>
      tpu.vector_store %arg5[%c0_29, %c0_30], %34 {strides = array<i32>} : memref<8x1xf32, #tpu.memory_space<vmem>>, vector<8x1xf32>,
    } else {
    }
    return
  }
  func.func @transform_0(%arg0: i32, %arg1: i32) -> (i32, i32) {
    %c0_i32 = arith.constant 0 : i32
    return %arg0, %arg1 : i32, i32
  }
  func.func @transform_1(%arg0: i32, %arg1: i32) -> (i32, i32) {
    %c0_i32 = arith.constant 0 : i32
    return %arg0, %arg1 : i32, i32
  }
  func.func @transform_2(%arg0: i32, %arg1: i32) -> (i32, i32) {
    %c0_i32 = arith.constant 0 : i32
    %c0_i32_0 = arith.constant 0 : i32
    return %arg0, %c0_i32 : i32, i32
  }
  func.func @transform_3(%arg0: i32, %arg1: i32) -> (i32, i32) {
    %c0_i32 = arith.constant 0 : i32
    %c0_i32_0 = arith.constant 0 : i32
    return %arg0, %c0_i32 : i32, i32
  }
}

</mosaic_0001>

<llo_original>
// kernel: squeeze.2
$region0: #{squeeze.2}
  %s0 = inlined_call_operand.vmem [shape: f32[2,4,256], index: 0, kind: input, shape index: {}]
  %s1 = inlined_call_operand.vmem [shape: f32[8,256], index: 1, kind: output, shape index: {}]
  $region1: #{squeeze.2} parent=0
    #allocation0 [shape = 'u8[16384]{0}', space=vmem, size = 0x4000, scoped, tag = 'scoped mem for input reshape']
    %s3 = sshllo.u32 0, 4
    %s4 = smul.addr 4, 3
    %s5 = scalar_lea.vmem %s0, %s4
    %v6 = vld [vmem:[%s5] sm:%s3]
    %s7 = scalar_lea.vmem [#allocation0], 24
    %8 = vst [vmem:[%s7] sm:%s3] %v6
    %s9 = smul.addr 4, 2
    %s10 = scalar_lea.vmem %s0, %s9
    %v11 = vld [vmem:[%s10] sm:%s3]
    %s12 = scalar_lea.vmem [#allocation0], 16
    %13 = vst [vmem:[%s12] sm:%s3] %v11
    %s14 = scalar_lea.vmem %s0, 4
    %v15 = vld [vmem:[%s14] sm:%s3]
    %s16 = scalar_lea.vmem [#allocation0], 8
    %17 = vst [vmem:[%s16] sm:%s3] %v15
    %v18 = vld [vmem:[%s0] sm:%s3]
    %19 = vst [vmem:[#allocation0] sm:%s3] %v18
    %v20 = vld [vmem:[#allocation0] sm:$0xf]
    %21 = vst [vmem:[%s1] sm:$0xf] %v20
    %s22 = scalar_lea.vmem [#allocation0], 8
    %v23 = vld [vmem:[%s22] sm:$0xf]
    %s24 = scalar_lea.vmem %s1, 8
    %25 = vst [vmem:[%s24] sm:$0xf] %v23
    %s26 = scalar_lea.vmem [#allocation0], 16
    %v27 = vld [vmem:[%s26] sm:$0xf]
    %s28 = scalar_lea.vmem %s1, 4
    %29 = vst [vmem:[%s28] sm:$0xf] %v27
    %s30 = scalar_lea.vmem [#allocation0], 24
    %v31 = vld [vmem:[%s30] sm:$0xf]
    %s32 = scalar_lea.vmem %s1, 12
    %33 = vst [vmem:[%s32] sm:$0xf] %v31

// kernel: task_wise_poisson_multinomial_loss.1
$region0: #{task_wise_poisson_multinomial_loss.1}
  #allocation0 [shape = 'u32[]', space=smem, size = 0x4, offset = 0x4, fixed_abs, tag = 'smem constant byte address 0x4 - core index']
  #allocation1 [shape = 'u32[144,128]{1,0:T(1,128)}', space=vmem, size = 0x12000, scoped, tag = 'internal scratch']
  #allocation2 [shape = 'f32[8,1]{1,0:T(8,128)}', space=vmem, size = 0x1000, scoped, tag = 'scratch operand']
  #allocation3 [shape = 'f32[8,1]{1,0:T(8,128)}', space=vmem, size = 0x1000, scoped, tag = 'scratch operand']
  #allocation4 [shape = 'f32[8,1]{1,0:T(8,128)}', space=vmem, size = 0x1000, scoped, tag = 'scratch operand']
  %s0 = inlined_call_operand.vmem [shape: f32[8,256], index: 0, kind: input, shape index: {}]
  %s1 = inlined_call_operand.vmem [shape: f32[8,256], index: 1, kind: input, shape index: {}]
  %s2 = inlined_call_operand.vmem [shape: f32[8,1], index: 2, kind: output, shape index: {0}]
  %s3 = inlined_call_operand.vmem [shape: f32[8,1], index: 3, kind: output, shape index: {1}]
  %4 = xla_tuple %s2, %s3
  %s5 = sld [smem:[#allocation0]]
  $region34: #{task_wise_poisson_multinomial_loss.1} parent=0
    _
  %s7 = ssub.s32 1, %s5
  %s8 = scalar_select 0, %s7, %s5
  // Predicated region
  $region2: #{task_wise_poisson_multinomial_loss.1} parent=0 // pred_check
    _
  $region3: #{task_wise_poisson_multinomial_loss.1} parent=0 // pred_check_branch
    %10 = sbr.rel (0) target = $region5
  $region4: #{task_wise_poisson_multinomial_loss.1} parent=0 // pred_region
    _
  $region5: #{task_wise_poisson_multinomial_loss.1} parent=0 // pred_fallthru
    _
  // Predicated region
  $region6: #{task_wise_poisson_multinomial_loss.1} parent=0 // pred_check
    _
  $region7: #{task_wise_poisson_multinomial_loss.1} parent=0 // pred_check_branch
    %12 = sbr.rel (0) target = $region9
  $region8: #{task_wise_poisson_multinomial_loss.1} parent=0 // pred_region
    _
  $region9: #{task_wise_poisson_multinomial_loss.1} parent=0 // pred_fallthru
    _
  %p13 = scmp.eq.s32.totalorder 0, 0
  // Predicated region
  $region10: #{task_wise_poisson_multinomial_loss.1} parent=0 // pred_check
    %p14 = pneg %p13
  $region11: #{task_wise_poisson_multinomial_loss.1} parent=0 // pred_check_branch
    %16 = sbr.rel (%p14) target = $region13
  $region12: #{task_wise_poisson_multinomial_loss.1} parent=0 // pred_region
    %vm17 = vcmask 7168
    %18 = vst.msk [vmem:[#allocation2] sm:$0xff] %vm17, 0.0
    %19 = vst.msk [vmem:[#allocation3] sm:$0xff] %vm17, 0.0
    %20 = vst.msk [vmem:[#allocation4] sm:$0xff] %vm17, 0.0
  $region13: #{task_wise_poisson_multinomial_loss.1} parent=0 // pred_fallthru
    _
  %v21 = vld [vmem:[%s0] sm:$0xff]
  %v22 = vld [vmem:[%s0 + $0x8] sm:$0xff]
  %v23 = vld [vmem:[%s1] sm:$0xff]
  %v24 = vld [vmem:[%s1 + $0x8] sm:$0xff]
  %v25 = vmul.f32 %v21, 1.442695
  %v26 = vpow.pop %v25
  %v27 = vmul.f32 %v22, 1.442695
  %v28 = vpow.pop %v27
  %v29 = vmul.f32 %v23, %v21
  %v30 = vmul.f32 %v24, %v22
  %v31 = vld [vmem:[#allocation2] sm:$0xff]
  %v32 = vadd.f32 %v26, %v28
  %33 = vadd.xlane.f32.xlu0 %v32
  %v34 = vpop.xlane.xlu0 %33
  %v35 = vadd.f32 %v31, %v34
  %vm36 = vcmask 7168
  %37 = vst.msk [vmem:[#allocation2] sm:$0xff] %vm36, %v35
  %v38 = vld [vmem:[#allocation3] sm:$0xff]
  %v39 = vadd.f32 %v23, %v24
  %40 = vadd.xlane.f32.xlu0 %v39
  %v41 = vpop.xlane.xlu0 %40
  %v42 = vadd.f32 %v38, %v41
  %43 = vst.msk [vmem:[#allocation3] sm:$0xff] %vm36, %v42
  %v44 = vld [vmem:[#allocation4] sm:$0xff]
  %v45 = vadd.f32 %v29, %v30
  %46 = vadd.xlane.f32.xlu0 %v45
  %v47 = vpop.xlane.xlu0 %46
  %v48 = vadd.f32 %v44, %v47
  %49 = vst.msk [vmem:[#allocation4] sm:$0xff] %vm36, %v48
  // Predicated region
  $region14: #{task_wise_poisson_multinomial_loss.1} parent=0 // pred_check
    %p50 = pneg %p13
  $region15: #{task_wise_poisson_multinomial_loss.1} parent=0 // pred_check_branch
    %52 = sbr.rel (%p50) target = $region17
  $region16: #{task_wise_poisson_multinomial_loss.1} parent=0 // pred_region
    %v53 = vld [vmem:[#allocation2] sm:$0xff]
    %v54 = vld [vmem:[#allocation3] sm:$0xff]
    %v55 = vld [vmem:[#allocation4] sm:$0xff]
    %v56 = vadd.f32 %v53, 1e-08
    %v57 = vlog2.pop %v56
    %v58 = vmul.f32 %v57, 0.6931472
    %v59 = vmul.f32 %v54, %v58
    %v60 = vsub.f32 %v53, %v59
    %v61 = vsub.f32 %v59, %v55
    %62 = vst.msk [vmem:[%s2] sm:$0xff] %vm36, %v60
    %63 = vst.msk [vmem:[%s3] sm:$0xff] %vm36, %v61
  $region17: #{task_wise_poisson_multinomial_loss.1} parent=0 // pred_fallthru
    _
  // Predicated region
  $region18: #{task_wise_poisson_multinomial_loss.1} parent=0 // pred_check
    _
  $region19: #{task_wise_poisson_multinomial_loss.1} parent=0 // pred_check_branch
    %65 = sbr.rel (0) target = $region21
  $region20: #{task_wise_poisson_multinomial_loss.1} parent=0 // pred_region
    _
  $region21: #{task_wise_poisson_multinomial_loss.1} parent=0 // pred_fallthru
    _
  // Predicated region
  $region22: #{task_wise_poisson_multinomial_loss.1} parent=0 // pred_check
    _
  $region23: #{task_wise_poisson_multinomial_loss.1} parent=0 // pred_check_branch
    %67 = sbr.rel (0) target = $region25
  $region24: #{task_wise_poisson_multinomial_loss.1} parent=0 // pred_region
    _
  $region25: #{task_wise_poisson_multinomial_loss.1} parent=0 // pred_fallthru
    _
  // Predicated region
  $region26: #{task_wise_poisson_multinomial_loss.1} parent=0 // pred_check
    _
  $region27: #{task_wise_poisson_multinomial_loss.1} parent=0 // pred_check_branch
    %69 = sbr.rel (0) target = $region29
  $region28: #{task_wise_poisson_multinomial_loss.1} parent=0 // pred_region
    _
  $region29: #{task_wise_poisson_multinomial_loss.1} parent=0 // pred_fallthru
    _
  // Predicated region
  $region30: #{task_wise_poisson_multinomial_loss.1} parent=0 // pred_check
    _
  $region31: #{task_wise_poisson_multinomial_loss.1} parent=0 // pred_check_branch
    %71 = sbr.rel (0) target = $region33
  $region32: #{task_wise_poisson_multinomial_loss.1} parent=0 // pred_region
    _
  $region33: #{task_wise_poisson_multinomial_loss.1} parent=0 // pred_fallthru
    _

</llo_original>
